<compile_context>
chip_gen: v6e
topology: v6e:2x2x1
jax: 0.10.0
libtpu: 0.0.40
codegen_flags: <defaults>
</compile_context>

<pallas_src>
import functools

import jax
import jax.numpy as jnp
from jax.experimental import pallas as pl
from jax.experimental.pallas import tpu as pltpu

T_MAX = 300
LANE = 128


# ---------------------------------------------------------------------------
# schedule (glue, mirrors linear_beta_schedule / Loss.__init__)
# ---------------------------------------------------------------------------
def make_schedule(t_max=T_MAX, start=1e-4, end=0.02):
    betas = jnp.linspace(start, end, t_max, dtype=jnp.float32)
    alphas = 1.0 - betas
    alphas_cumprod = jnp.cumprod(alphas, axis=0)
    sqrt_alphas_cumprod = jnp.sqrt(alphas_cumprod)
    sqrt_one_minus_alphas_cumprod = jnp.sqrt(1.0 - alphas_cumprod)
    return sqrt_alphas_cumprod, sqrt_one_minus_alphas_cumprod


# ---------------------------------------------------------------------------
# Fused kernel: forward_diffusion + stand-in model + L1-mean
# ---------------------------------------------------------------------------
def _fused_loss_kernel(t_ref, sqa_ref, sqom_ref, w_ref, bias_ref, temb_ref,
                       x0_ref, noise_ref, out_ref, *, B, C, inv_count):
    # x0_ref / noise_ref: (B, C*SUB, LANE)  -- one packed (8,128) f32 slab
    # per batch element (C=4 channels x SUB=2 sublanes each).
    rows = x0_ref.shape[1]
    SUB = rows // C

    # Vector accumulator: hot loop is pure VPU adds, XLU reduction deferred.
    acc = jnp.zeros((SUB, LANE), jnp.float32)

    for b in range(B):  # fully unrolled at trace time; single kernel invocation
        # in-kernel gather of the per-batch timestep / schedule values (SMEM)
        ti = t_ref[b]
        a = sqa_ref[ti]    # sqrt(alphas_cumprod)[t_b]
        s = sqom_ref[ti]   # sqrt(1 - alphas_cumprod)[t_b]

        x0_b = x0_ref[b]   # (C*SUB, LANE) -- full packed vreg
        nz_b = noise_ref[b]

        # forward diffusion on the packed slab; a/s are splat exactly once
        # per batch element and reused across all channels (no duplicate
        # broadcast_in_dim in the trace).
        xn_b = a * x0_b + s * nz_b

        # per-channel (SUB, LANE) views; static slices within the (8,128) tile
        xn = [xn_b[c * SUB:(c + 1) * SUB, :] for c in range(C)]

        # channel mix: pred[c_out] = sum_cin W[cin,cout]*xn[cin] + bias + temb[t]
        # kept as unrolled broadcast-scalar FMAs (4x4 mix: MXU not worth it),
        # fused with the L1 partial sum (pred never leaves vregs).
        for c_out in range(C):
            pred = xn[0] * w_ref[0 * C + c_out]
            for c_in in range(1, C):
                pred = pred + xn[c_in] * w_ref[c_in * C + c_out]
            pred = pred + (bias_ref[c_out] + temb_ref[ti * C + c_out])
            nz_c = nz_b[c_out * SUB:(c_out + 1) * SUB, :]
            acc = acc + jnp.abs(nz_c - pred)

    # single cross-lane reduction + one scale, once, at the very end
    out_ref[...] = jnp.sum(acc, keepdims=True) * inv_count


# ---------------------------------------------------------------------------
# Loss.forward(model, image_0, t, device)  -- model is the synthetic stand-in
# ---------------------------------------------------------------------------
def loss_forward(image_0, t, noise, params, sqa, sqom):
    B, C, H, W = image_0.shape
    HW = H * W
    assert HW % LANE == 0, "spatial size must be a multiple of 128 lanes"
    SUB = HW // LANE

    # free row-major reshapes: NCHW with HW split into (SUB, 128) so one batch
    # element is a dense (C*SUB, 128) slab (exactly one (8,128) vreg here).
    x0_flat = image_0.reshape(B, C * SUB, LANE)
    noise_flat = noise.reshape(B, C * SUB, LANE)

    # flatten small tables to 1-D so SMEM padding stays tiny
    w_flat = params["w"].reshape(C * C)            # w[c_in, c_out] -> c_in*C + c_out
    bias = params["bias"]                          # (C,)
    temb_flat = params["temb"].reshape(T_MAX * C)  # temb[t, c] -> t*C + c

    kernel = functools.partial(
        _fused_loss_kernel, B=B, C=C, inv_count=1.0 / float(B * C * HW))

    smem = pl.BlockSpec(memory_space=pltpu.MemorySpace.SMEM)
    vmem = pl.BlockSpec(memory_space=pltpu.MemorySpace.VMEM)

    out = pl.pallas_call(
        kernel,
        out_shape=jax.ShapeDtypeStruct((1, 1), jnp.float32),
        in_specs=[
            smem,   # t            (B,)        int32
            smem,   # sqa table    (T_MAX,)    f32
            smem,   # sqom table   (T_MAX,)    f32
            smem,   # w (flat)     (C*C,)      f32
            smem,   # bias         (C,)        f32
            smem,   # temb (flat)  (T_MAX*C,)  f32
            vmem,   # x0           (B, C*SUB, 128)
            vmem,   # noise        (B, C*SUB, 128)
        ],
        out_specs=vmem,
    )(t, sqa, sqom, w_flat, bias, temb_flat, x0_flat, noise_flat)
    return out[0, 0]


if __name__ == "__main__":
    key = jax.random.PRNGKey(0)
    k_img, k_noise, k_w, k_b, k_temb = jax.random.split(key, 5)

    B, C, H, W = 2, 4, 16, 16
    image_0 = jax.random.normal(k_img, (B, C, H, W), dtype=jnp.float32)
    t = jnp.array([17, 123], dtype=jnp.int32)
    # TODO(synk): torch.randn_like inside forward_diffusion_sample is replaced
    # by host-side jax.random.normal (no torch-bit-exact RNG on TPU).
    noise = jax.random.normal(k_noise, (B, C, H, W), dtype=jnp.float32)

    params = {
        "w": 0.1 * jax.random.normal(k_w, (C, C), dtype=jnp.float32),
        "bias": 0.1 * jax.random.normal(k_b, (C,), dtype=jnp.float32),
        "temb": 0.1 * jax.random.normal(k_temb, (T_MAX, C), dtype=jnp.float32),
    }

    sqa, sqom = make_schedule()

    loss = loss_forward(image_0, t, noise, params, sqa, sqom)
    loss = jax.block_until_ready(loss)

    # pure-JAX reference check (same math as the stand-in model)
    a_t = sqa[t].reshape(B, 1, 1, 1)
    s_t = sqom[t].reshape(B, 1, 1, 1)
    x_noisy_ref = a_t * image_0 + s_t * noise
    xf = jnp.transpose(x_noisy_ref, (0, 2, 3, 1)).reshape(B, H * W, C)
    pred_ref = xf @ params["w"] + (params["bias"][None, :] + params["temb"][t])[:, None, :]
    pred_ref = jnp.transpose(pred_ref.reshape(B, H, W, C), (0, 3, 1, 2))
    loss_ref = jnp.mean(jnp.abs(noise - pred_ref))
    assert jnp.allclose(loss, loss_ref, atol=1e-5, rtol=1e-5), (loss, loss_ref)

    print("KERNEL_OK")
</pallas_src>

<mosaic_0001>
module attributes {stable_mosaic.version = 11 : i64} {
  func.func @_fused_loss_kernel(%arg0: memref<2xi32, #tpu.memory_space<smem>>, %arg1: memref<300xf32, #tpu.memory_space<smem>>, %arg2: memref<300xf32, #tpu.memory_space<smem>>, %arg3: memref<16xf32, #tpu.memory_space<smem>>, %arg4: memref<4xf32, #tpu.memory_space<smem>>, %arg5: memref<1200xf32, #tpu.memory_space<smem>>, %arg6: memref<2x8x128xf32, #tpu.memory_space<vmem>>, %arg7: memref<2x8x128xf32, #tpu.memory_space<vmem>>, %arg8: memref<1x1xf32, #tpu.memory_space<vmem>>) attributes {dimension_semantics = [], scalar_prefetch = 0 : i64, scratch_operands = 0 : i64, tpu.core_type = #tpu.core_type<tc>} {
    %cst = arith.constant 0.000000e+00 : f32
    %0 = vector.broadcast %cst : f32 to vector<2x128xf32>
    %c0 = arith.constant 0 : index
    %1 = memref.load %arg0[%c0] : memref<2xi32, #tpu.memory_space<smem>>
    %2 = arith.index_cast %1 : i32 to index
    %3 = memref.load %arg1[%2] : memref<300xf32, #tpu.memory_space<smem>>
    %4 = arith.index_cast %1 : i32 to index
    %5 = memref.load %arg2[%4] : memref<300xf32, #tpu.memory_space<smem>>
    %c0_0 = arith.constant 0 : index
    %c0_1 = arith.constant 0 : index
    %c0_2 = arith.constant 0 : index
    %6 = vector.load %arg6[%c0_0, %c0_1, %c0_2] : memref<2x8x128xf32, #tpu.memory_space<vmem>>, vector<1x8x128xf32>
    %7 = vector.shape_cast %6 : vector<1x8x128xf32> to vector<8x128xf32>
    %c0_3 = arith.constant 0 : index
    %c0_4 = arith.constant 0 : index
    %c0_5 = arith.constant 0 : index
    %8 = vector.load %arg7[%c0_3, %c0_4, %c0_5] : memref<2x8x128xf32, #tpu.memory_space<vmem>>, vector<1x8x128xf32>
    %9 = vector.shape_cast %8 : vector<1x8x128xf32> to vector<8x128xf32>
    %10 = vector.broadcast %3 : f32 to vector<8x128xf32>
    %11 = arith.mulf %10, %7 : vector<8x128xf32>
    %12 = vector.broadcast %5 : f32 to vector<8x128xf32>
    %13 = arith.mulf %12, %9 : vector<8x128xf32>
    %14 = arith.addf %11, %13 : vector<8x128xf32>
    %15 = vector.extract_strided_slice %14 {offsets = [0, 0], sizes = [2, 128], strides = [1, 1]} : vector<8x128xf32> to vector<2x128xf32>
    %16 = vector.extract_strided_slice %14 {offsets = [2, 0], sizes = [2, 128], strides = [1, 1]} : vector<8x128xf32> to vector<2x128xf32>
    %17 = vector.extract_strided_slice %14 {offsets = [4, 0], sizes = [2, 128], strides = [1, 1]} : vector<8x128xf32> to vector<2x128xf32>
    %18 = vector.extract_strided_slice %14 {offsets = [6, 0], sizes = [2, 128], strides = [1, 1]} : vector<8x128xf32> to vector<2x128xf32>
    %c0_6 = arith.constant 0 : index
    %19 = memref.load %arg3[%c0_6] : memref<16xf32, #tpu.memory_space<smem>>
    %20 = vector.broadcast %19 : f32 to vector<2x128xf32>
    %21 = arith.mulf %15, %20 : vector<2x128xf32>
    %c4 = arith.constant 4 : index
    %22 = memref.load %arg3[%c4] : memref<16xf32, #tpu.memory_space<smem>>
    %23 = vector.broadcast %22 : f32 to vector<2x128xf32>
    %24 = arith.mulf %16, %23 : vector<2x128xf32>
    %25 = arith.addf %21, %24 : vector<2x128xf32>
    %c8 = arith.constant 8 : index
    %26 = memref.load %arg3[%c8] : memref<16xf32, #tpu.memory_space<smem>>
    %27 = vector.broadcast %26 : f32 to vector<2x128xf32>
    %28 = arith.mulf %17, %27 : vector<2x128xf32>
    %29 = arith.addf %25, %28 : vector<2x128xf32>
    %c12 = arith.constant 12 : index
    %30 = memref.load %arg3[%c12] : memref<16xf32, #tpu.memory_space<smem>>
    %31 = vector.broadcast %30 : f32 to vector<2x128xf32>
    %32 = arith.mulf %18, %31 : vector<2x128xf32>
    %33 = arith.addf %29, %32 : vector<2x128xf32>
    %c0_7 = arith.constant 0 : index
    %34 = memref.load %arg4[%c0_7] : memref<4xf32, #tpu.memory_space<smem>>
    %c4_i32 = arith.constant 4 : i32
    %35 = arith.muli %1, %c4_i32 : i32
    %c0_i32 = arith.constant 0 : i32
    %36 = arith.addi %35, %c0_i32 : i32
    %37 = arith.index_cast %36 : i32 to index
    %38 = memref.load %arg5[%37] : memref<1200xf32, #tpu.memory_space<smem>>
    %39 = arith.addf %34, %38 : f32
    %40 = vector.broadcast %39 : f32 to vector<2x128xf32>
    %41 = arith.addf %33, %40 : vector<2x128xf32>
    %42 = vector.extract_strided_slice %9 {offsets = [0, 0], sizes = [2, 128], strides = [1, 1]} : vector<8x128xf32> to vector<2x128xf32>
    %43 = arith.subf %42, %41 : vector<2x128xf32>
    %44 = math.absf %43 : vector<2x128xf32>
    %45 = arith.addf %0, %44 : vector<2x128xf32>
    %c1 = arith.constant 1 : index
    %46 = memref.load %arg3[%c1] : memref<16xf32, #tpu.memory_space<smem>>
    %47 = vector.broadcast %46 : f32 to vector<2x128xf32>
    %48 = arith.mulf %15, %47 : vector<2x128xf32>
    %c5 = arith.constant 5 : index
    %49 = memref.load %arg3[%c5] : memref<16xf32, #tpu.memory_space<smem>>
    %50 = vector.broadcast %49 : f32 to vector<2x128xf32>
    %51 = arith.mulf %16, %50 : vector<2x128xf32>
    %52 = arith.addf %48, %51 : vector<2x128xf32>
    %c9 = arith.constant 9 : index
    %53 = memref.load %arg3[%c9] : memref<16xf32, #tpu.memory_space<smem>>
    %54 = vector.broadcast %53 : f32 to vector<2x128xf32>
    %55 = arith.mulf %17, %54 : vector<2x128xf32>
    %56 = arith.addf %52, %55 : vector<2x128xf32>
    %c13 = arith.constant 13 : index
    %57 = memref.load %arg3[%c13] : memref<16xf32, #tpu.memory_space<smem>>
    %58 = vector.broadcast %57 : f32 to vector<2x128xf32>
    %59 = arith.mulf %18, %58 : vector<2x128xf32>
    %60 = arith.addf %56, %59 : vector<2x128xf32>
    %c1_8 = arith.constant 1 : index
    %61 = memref.load %arg4[%c1_8] : memref<4xf32, #tpu.memory_space<smem>>
    %c4_i32_9 = arith.constant 4 : i32
    %62 = arith.muli %1, %c4_i32_9 : i32
    %c1_i32 = arith.constant 1 : i32
    %63 = arith.addi %62, %c1_i32 : i32
    %64 = arith.index_cast %63 : i32 to index
    %65 = memref.load %arg5[%64] : memref<1200xf32, #tpu.memory_space<smem>>
    %66 = arith.addf %61, %65 : f32
    %67 = vector.broadcast %66 : f32 to vector<2x128xf32>
    %68 = arith.addf %60, %67 : vector<2x128xf32>
    %69 = vector.extract_strided_slice %9 {offsets = [2, 0], sizes = [2, 128], strides = [1, 1]} : vector<8x128xf32> to vector<2x128xf32>
    %70 = arith.subf %69, %68 : vector<2x128xf32>
    %71 = math.absf %70 : vector<2x128xf32>
    %72 = arith.addf %45, %71 : vector<2x128xf32>
    %c2 = arith.constant 2 : index
    %73 = memref.load %arg3[%c2] : memref<16xf32, #tpu.memory_space<smem>>
    %74 = vector.broadcast %73 : f32 to vector<2x128xf32>
    %75 = arith.mulf %15, %74 : vector<2x128xf32>
    %c6 = arith.constant 6 : index
    %76 = memref.load %arg3[%c6] : memref<16xf32, #tpu.memory_space<smem>>
    %77 = vector.broadcast %76 : f32 to vector<2x128xf32>
    %78 = arith.mulf %16, %77 : vector<2x128xf32>
    %79 = arith.addf %75, %78 : vector<2x128xf32>
    %c10 = arith.constant 10 : index
    %80 = memref.load %arg3[%c10] : memref<16xf32, #tpu.memory_space<smem>>
    %81 = vector.broadcast %80 : f32 to vector<2x128xf32>
    %82 = arith.mulf %17, %81 : vector<2x128xf32>
    %83 = arith.addf %79, %82 : vector<2x128xf32>
    %c14 = arith.constant 14 : index
    %84 = memref.load %arg3[%c14] : memref<16xf32, #tpu.memory_space<smem>>
    %85 = vector.broadcast %84 : f32 to vector<2x128xf32>
    %86 = arith.mulf %18, %85 : vector<2x128xf32>
    %87 = arith.addf %83, %86 : vector<2x128xf32>
    %c2_10 = arith.constant 2 : index
    %88 = memref.load %arg4[%c2_10] : memref<4xf32, #tpu.memory_space<smem>>
    %c4_i32_11 = arith.constant 4 : i32
    %89 = arith.muli %1, %c4_i32_11 : i32
    %c2_i32 = arith.constant 2 : i32
    %90 = arith.addi %89, %c2_i32 : i32
    %91 = arith.index_cast %90 : i32 to index
    %92 = memref.load %arg5[%91] : memref<1200xf32, #tpu.memory_space<smem>>
    %93 = arith.addf %88, %92 : f32
    %94 = vector.broadcast %93 : f32 to vector<2x128xf32>
    %95 = arith.addf %87, %94 : vector<2x128xf32>
    %96 = vector.extract_strided_slice %9 {offsets = [4, 0], sizes = [2, 128], strides = [1, 1]} : vector<8x128xf32> to vector<2x128xf32>
    %97 = arith.subf %96, %95 : vector<2x128xf32>
    %98 = math.absf %97 : vector<2x128xf32>
    %99 = arith.addf %72, %98 : vector<2x128xf32>
    %c3 = arith.constant 3 : index
    %100 = memref.load %arg3[%c3] : memref<16xf32, #tpu.memory_space<smem>>
    %101 = vector.broadcast %100 : f32 to vector<2x128xf32>
    %102 = arith.mulf %15, %101 : vector<2x128xf32>
    %c7 = arith.constant 7 : index
    %103 = memref.load %arg3[%c7] : memref<16xf32, #tpu.memory_space<smem>>
    %104 = vector.broadcast %103 : f32 to vector<2x128xf32>
    %105 = arith.mulf %16, %104 : vector<2x128xf32>
    %106 = arith.addf %102, %105 : vector<2x128xf32>
    %c11 = arith.constant 11 : index
    %107 = memref.load %arg3[%c11] : memref<16xf32, #tpu.memory_space<smem>>
    %108 = vector.broadcast %107 : f32 to vector<2x128xf32>
    %109 = arith.mulf %17, %108 : vector<2x128xf32>
    %110 = arith.addf %106, %109 : vector<2x128xf32>
    %c15 = arith.constant 15 : index
    %111 = memref.load %arg3[%c15] : memref<16xf32, #tpu.memory_space<smem>>
    %112 = vector.broadcast %111 : f32 to vector<2x128xf32>
    %113 = arith.mulf %18, %112 : vector<2x128xf32>
    %114 = arith.addf %110, %113 : vector<2x128xf32>
    %c3_12 = arith.constant 3 : index
    %115 = memref.load %arg4[%c3_12] : memref<4xf32, #tpu.memory_space<smem>>
    %c4_i32_13 = arith.constant 4 : i32
    %116 = arith.muli %1, %c4_i32_13 : i32
    %c3_i32 = arith.constant 3 : i32
    %117 = arith.addi %116, %c3_i32 : i32
    %118 = arith.index_cast %117 : i32 to index
    %119 = memref.load %arg5[%118] : memref<1200xf32, #tpu.memory_space<smem>>
    %120 = arith.addf %115, %119 : f32
    %121 = vector.broadcast %120 : f32 to vector<2x128xf32>
    %122 = arith.addf %114, %121 : vector<2x128xf32>
    %123 = vector.extract_strided_slice %9 {offsets = [6, 0], sizes = [2, 128], strides = [1, 1]} : vector<8x128xf32> to vector<2x128xf32>
    %124 = arith.subf %123, %122 : vector<2x128xf32>
    %125 = math.absf %124 : vector<2x128xf32>
    %126 = arith.addf %99, %125 : vector<2x128xf32>
    %c1_14 = arith.constant 1 : index
    %127 = memref.load %arg0[%c1_14] : memref<2xi32, #tpu.memory_space<smem>>
    %128 = arith.index_cast %127 : i32 to index
    %129 = memref.load %arg1[%128] : memref<300xf32, #tpu.memory_space<smem>>
    %130 = arith.index_cast %127 : i32 to index
    %131 = memref.load %arg2[%130] : memref<300xf32, #tpu.memory_space<smem>>
    %c1_15 = arith.constant 1 : index
    %c0_16 = arith.constant 0 : index
    %c0_17 = arith.constant 0 : index
    %132 = vector.load %arg6[%c1_15, %c0_16, %c0_17] : memref<2x8x128xf32, #tpu.memory_space<vmem>>, vector<1x8x128xf32>
    %133 = vector.shape_cast %132 : vector<1x8x128xf32> to vector<8x128xf32>
    %c1_18 = arith.constant 1 : index
    %c0_19 = arith.constant 0 : index
    %c0_20 = arith.constant 0 : index
    %134 = vector.load %arg7[%c1_18, %c0_19, %c0_20] : memref<2x8x128xf32, #tpu.memory_space<vmem>>, vector<1x8x128xf32>
    %135 = vector.shape_cast %134 : vector<1x8x128xf32> to vector<8x128xf32>
    %136 = vector.broadcast %129 : f32 to vector<8x128xf32>
    %137 = arith.mulf %136, %133 : vector<8x128xf32>
    %138 = vector.broadcast %131 : f32 to vector<8x128xf32>
    %139 = arith.mulf %138, %135 : vector<8x128xf32>
    %140 = arith.addf %137, %139 : vector<8x128xf32>
    %141 = vector.extract_strided_slice %140 {offsets = [0, 0], sizes = [2, 128], strides = [1, 1]} : vector<8x128xf32> to vector<2x128xf32>
    %142 = vector.extract_strided_slice %140 {offsets = [2, 0], sizes = [2, 128], strides = [1, 1]} : vector<8x128xf32> to vector<2x128xf32>
    %143 = vector.extract_strided_slice %140 {offsets = [4, 0], sizes = [2, 128], strides = [1, 1]} : vector<8x128xf32> to vector<2x128xf32>
    %144 = vector.extract_strided_slice %140 {offsets = [6, 0], sizes = [2, 128], strides = [1, 1]} : vector<8x128xf32> to vector<2x128xf32>
    %c0_21 = arith.constant 0 : index
    %145 = memref.load %arg3[%c0_21] : memref<16xf32, #tpu.memory_space<smem>>
    %146 = vector.broadcast %145 : f32 to vector<2x128xf32>
    %147 = arith.mulf %141, %146 : vector<2x128xf32>
    %c4_22 = arith.constant 4 : index
    %148 = memref.load %arg3[%c4_22] : memref<16xf32, #tpu.memory_space<smem>>
    %149 = vector.broadcast %148 : f32 to vector<2x128xf32>
    %150 = arith.mulf %142, %149 : vector<2x128xf32>
    %151 = arith.addf %147, %150 : vector<2x128xf32>
    %c8_23 = arith.constant 8 : index
    %152 = memref.load %arg3[%c8_23] : memref<16xf32, #tpu.memory_space<smem>>
    %153 = vector.broadcast %152 : f32 to vector<2x128xf32>
    %154 = arith.mulf %143, %153 : vector<2x128xf32>
    %155 = arith.addf %151, %154 : vector<2x128xf32>
    %c12_24 = arith.constant 12 : index
    %156 = memref.load %arg3[%c12_24] : memref<16xf32, #tpu.memory_space<smem>>
    %157 = vector.broadcast %156 : f32 to vector<2x128xf32>
    %158 = arith.mulf %144, %157 : vector<2x128xf32>
    %159 = arith.addf %155, %158 : vector<2x128xf32>
    %c0_25 = arith.constant 0 : index
    %160 = memref.load %arg4[%c0_25] : memref<4xf32, #tpu.memory_space<smem>>
    %c4_i32_26 = arith.constant 4 : i32
    %161 = arith.muli %127, %c4_i32_26 : i32
    %c0_i32_27 = arith.constant 0 : i32
    %162 = arith.addi %161, %c0_i32_27 : i32
    %163 = arith.index_cast %162 : i32 to index
    %164 = memref.load %arg5[%163] : memref<1200xf32, #tpu.memory_space<smem>>
    %165 = arith.addf %160, %164 : f32
    %166 = vector.broadcast %165 : f32 to vector<2x128xf32>
    %167 = arith.addf %159, %166 : vector<2x128xf32>
    %168 = vector.extract_strided_slice %135 {offsets = [0, 0], sizes = [2, 128], strides = [1, 1]} : vector<8x128xf32> to vector<2x128xf32>
    %169 = arith.subf %168, %167 : vector<2x128xf32>
    %170 = math.absf %169 : vector<2x128xf32>
    %171 = arith.addf %126, %170 : vector<2x128xf32>
    %c1_28 = arith.constant 1 : index
    %172 = memref.load %arg3[%c1_28] : memref<16xf32, #tpu.memory_space<smem>>
    %173 = vector.broadcast %172 : f32 to vector<2x128xf32>
    %174 = arith.mulf %141, %173 : vector<2x128xf32>
    %c5_29 = arith.constant 5 : index
    %175 = memref.load %arg3[%c5_29] : memref<16xf32, #tpu.memory_space<smem>>
    %176 = vector.broadcast %175 : f32 to vector<2x128xf32>
    %177 = arith.mulf %142, %176 : vector<2x128xf32>
    %178 = arith.addf %174, %177 : vector<2x128xf32>
    %c9_30 = arith.constant 9 : index
    %179 = memref.load %arg3[%c9_30] : memref<16xf32, #tpu.memory_space<smem>>
    %180 = vector.broadcast %179 : f32 to vector<2x128xf32>
    %181 = arith.mulf %143, %180 : vector<2x128xf32>
    %182 = arith.addf %178, %181 : vector<2x128xf32>
    %c13_31 = arith.constant 13 : index
    %183 = memref.load %arg3[%c13_31] : memref<16xf32, #tpu.memory_space<smem>>
    %184 = vector.broadcast %183 : f32 to vector<2x128xf32>
    %185 = arith.mulf %144, %184 : vector<2x128xf32>
    %186 = arith.addf %182, %185 : vector<2x128xf32>
    %c1_32 = arith.constant 1 : index
    %187 = memref.load %arg4[%c1_32] : memref<4xf32, #tpu.memory_space<smem>>
    %c4_i32_33 = arith.constant 4 : i32
    %188 = arith.muli %127, %c4_i32_33 : i32
    %c1_i32_34 = arith.constant 1 : i32
    %189 = arith.addi %188, %c1_i32_34 : i32
    %190 = arith.index_cast %189 : i32 to index
    %191 = memref.load %arg5[%190] : memref<1200xf32, #tpu.memory_space<smem>>
    %192 = arith.addf %187, %191 : f32
    %193 = vector.broadcast %192 : f32 to vector<2x128xf32>
    %194 = arith.addf %186, %193 : vector<2x128xf32>
    %195 = vector.extract_strided_slice %135 {offsets = [2, 0], sizes = [2, 128], strides = [1, 1]} : vector<8x128xf32> to vector<2x128xf32>
    %196 = arith.subf %195, %194 : vector<2x128xf32>
    %197 = math.absf %196 : vector<2x128xf32>
    %198 = arith.addf %171, %197 : vector<2x128xf32>
    %c2_35 = arith.constant 2 : index
    %199 = memref.load %arg3[%c2_35] : memref<16xf32, #tpu.memory_space<smem>>
    %200 = vector.broadcast %199 : f32 to vector<2x128xf32>
    %201 = arith.mulf %141, %200 : vector<2x128xf32>
    %c6_36 = arith.constant 6 : index
    %202 = memref.load %arg3[%c6_36] : memref<16xf32, #tpu.memory_space<smem>>
    %203 = vector.broadcast %202 : f32 to vector<2x128xf32>
    %204 = arith.mulf %142, %203 : vector<2x128xf32>
    %205 = arith.addf %201, %204 : vector<2x128xf32>
    %c10_37 = arith.constant 10 : index
    %206 = memref.load %arg3[%c10_37] : memref<16xf32, #tpu.memory_space<smem>>
    %207 = vector.broadcast %206 : f32 to vector<2x128xf32>
    %208 = arith.mulf %143, %207 : vector<2x128xf32>
    %209 = arith.addf %205, %208 : vector<2x128xf32>
    %c14_38 = arith.constant 14 : index
    %210 = memref.load %arg3[%c14_38] : memref<16xf32, #tpu.memory_space<smem>>
    %211 = vector.broadcast %210 : f32 to vector<2x128xf32>
    %212 = arith.mulf %144, %211 : vector<2x128xf32>
    %213 = arith.addf %209, %212 : vector<2x128xf32>
    %c2_39 = arith.constant 2 : index
    %214 = memref.load %arg4[%c2_39] : memref<4xf32, #tpu.memory_space<smem>>
    %c4_i32_40 = arith.constant 4 : i32
    %215 = arith.muli %127, %c4_i32_40 : i32
    %c2_i32_41 = arith.constant 2 : i32
    %216 = arith.addi %215, %c2_i32_41 : i32
    %217 = arith.index_cast %216 : i32 to index
    %218 = memref.load %arg5[%217] : memref<1200xf32, #tpu.memory_space<smem>>
    %219 = arith.addf %214, %218 : f32
    %220 = vector.broadcast %219 : f32 to vector<2x128xf32>
    %221 = arith.addf %213, %220 : vector<2x128xf32>
    %222 = vector.extract_strided_slice %135 {offsets = [4, 0], sizes = [2, 128], strides = [1, 1]} : vector<8x128xf32> to vector<2x128xf32>
    %223 = arith.subf %222, %221 : vector<2x128xf32>
    %224 = math.absf %223 : vector<2x128xf32>
    %225 = arith.addf %198, %224 : vector<2x128xf32>
    %c3_42 = arith.constant 3 : index
    %226 = memref.load %arg3[%c3_42] : memref<16xf32, #tpu.memory_space<smem>>
    %227 = vector.broadcast %226 : f32 to vector<2x128xf32>
    %228 = arith.mulf %141, %227 : vector<2x128xf32>
    %c7_43 = arith.constant 7 : index
    %229 = memref.load %arg3[%c7_43] : memref<16xf32, #tpu.memory_space<smem>>
    %230 = vector.broadcast %229 : f32 to vector<2x128xf32>
    %231 = arith.mulf %142, %230 : vector<2x128xf32>
    %232 = arith.addf %228, %231 : vector<2x128xf32>
    %c11_44 = arith.constant 11 : index
    %233 = memref.load %arg3[%c11_44] : memref<16xf32, #tpu.memory_space<smem>>
    %234 = vector.broadcast %233 : f32 to vector<2x128xf32>
    %235 = arith.mulf %143, %234 : vector<2x128xf32>
    %236 = arith.addf %232, %235 : vector<2x128xf32>
    %c15_45 = arith.constant 15 : index
    %237 = memref.load %arg3[%c15_45] : memref<16xf32, #tpu.memory_space<smem>>
    %238 = vector.broadcast %237 : f32 to vector<2x128xf32>
    %239 = arith.mulf %144, %238 : vector<2x128xf32>
    %240 = arith.addf %236, %239 : vector<2x128xf32>
    %c3_46 = arith.constant 3 : index
    %241 = memref.load %arg4[%c3_46] : memref<4xf32, #tpu.memory_space<smem>>
    %c4_i32_47 = arith.constant 4 : i32
    %242 = arith.muli %127, %c4_i32_47 : i32
    %c3_i32_48 = arith.constant 3 : i32
    %243 = arith.addi %242, %c3_i32_48 : i32
    %244 = arith.index_cast %243 : i32 to index
    %245 = memref.load %arg5[%244] : memref<1200xf32, #tpu.memory_space<smem>>
    %246 = arith.addf %241, %245 : f32
    %247 = vector.broadcast %246 : f32 to vector<2x128xf32>
    %248 = arith.addf %240, %247 : vector<2x128xf32>
    %249 = vector.extract_strided_slice %135 {offsets = [6, 0], sizes = [2, 128], strides = [1, 1]} : vector<8x128xf32> to vector<2x128xf32>
    %250 = arith.subf %249, %248 : vector<2x128xf32>
    %251 = math.absf %250 : vector<2x128xf32>
    %252 = arith.addf %225, %251 : vector<2x128xf32>
    %253 = vector.shape_cast %252 : vector<2x128xf32> to vector<1x2x128xf32>
    %cst_49 = arith.constant dense<0.000000e+00> : vector<1xf32>
    %254 = vector.multi_reduction <add>, %253, %cst_49 [1, 2] : vector<1x2x128xf32> to vector<1xf32>
    %255 = vector.shape_cast %254 : vector<1xf32> to vector<1x1x1xf32>
    %256 = vector.extract %255[0, 0, 0] : f32 from vector<1x1x1xf32>
    %257 = vector.broadcast %256 : f32 to vector<1x1xf32>
    %cst_50 = arith.constant 4.8828125E-4 : f32
    %258 = vector.broadcast %cst_50 : f32 to vector<1x1xf32>
    %259 = arith.mulf %257, %258 : vector<1x1xf32>
    %c0_51 = arith.constant 0 : index
    %c0_52 = arith.constant 0 : index
    %260 = vector.load %arg8[%c0_51, %c0_52] : memref<1x1xf32, #tpu.memory_space<vmem>>, vector<1x1xf32>
    tpu.vector_store %arg8[%c0_51, %c0_52], %259 {strides = array<i32>} : memref<1x1xf32, #tpu.memory_space<vmem>>, vector<1x1xf32>,
    return
  }
}

</mosaic_0001>

<llo_original>
// kernel: tpu_custom_call.1
$region0: #{tpu_custom_call.1}
  #allocation0 [shape = 'u32[]', space=smem, size = 0x4, offset = 0x4, fixed_abs, tag = 'smem constant byte address 0x4 - core index']
  #allocation1 [shape = 'u32[144,128]{1,0:T(1,128)}', space=vmem, size = 0x12000, scoped, tag = 'internal scratch']
  %s0 = inlined_call_operand.hbm [shape: s32[2], index: 0, kind: input, shape index: {}]
  %s1 = inlined_call_operand.hbm [shape: f32[300], index: 1, kind: input, shape index: {}]
  %s2 = inlined_call_operand.hbm [shape: f32[300], index: 2, kind: input, shape index: {}]
  %s3 = inlined_call_operand.vmem [shape: f32[16], index: 3, kind: input, shape index: {}]
  %s4 = inlined_call_operand.vmem [shape: f32[4], index: 4, kind: input, shape index: {}]
  %s5 = inlined_call_operand.hbm [shape: f32[1200], index: 5, kind: input, shape index: {}]
  %s6 = inlined_call_operand.hbm [shape: f32[2,8,128], index: 6, kind: input, shape index: {}]
  %s7 = inlined_call_operand.hbm [shape: f32[2,8,128], index: 7, kind: input, shape index: {}]
  %s8 = inlined_call_operand.hbm [shape: f32[1,1], index: 8, kind: output, shape index: {}]
  %s9 = sld [smem:[#allocation0]]
  $region74: #{tpu_custom_call.1} parent=0
    _
  %s11 = ssub.s32 1, %s9
  %s12 = scalar_select 0, %s11, %s9
  $region1: #{tpu_custom_call.1} parent=0
    #allocation2 [shape = 'u8[512]{0}', space=smem, size = 0x200, scoped, tag = 'input window, operand 0, single buffered']
    #allocation3 [shape = 's32[1]{0}', space=sflag, size = 0x4, scoped, tag = 'scoped memory for tpu_custom_call.1']
    #allocation4 [shape = 's32[1]{0}', space=sflag, size = 0x4, scoped, tag = 'scoped memory for tpu_custom_call.1']
    #allocation5 [shape = 's32[1]{0}', space=sflag, size = 0x4, scoped, tag = 'scoped memory for tpu_custom_call.1']
    #allocation6 [shape = 's32[1]{0}', space=sflag, size = 0x4, scoped, tag = 'scoped memory for tpu_custom_call.1']
    #allocation7 [shape = 'u8[1536]{0}', space=smem, size = 0x600, scoped, tag = 'input window, operand 1, single buffered']
    #allocation8 [shape = 's32[1]{0}', space=sflag, size = 0x4, scoped, tag = 'scoped memory for tpu_custom_call.1']
    #allocation9 [shape = 'u8[1536]{0}', space=smem, size = 0x600, scoped, tag = 'input window, operand 2, single buffered']
    #allocation10 [shape = 'u8[512]{0}', space=smem, size = 0x200, scoped, tag = 'input window, operand 3, single buffered']
    #allocation11 [shape = 'u8[512]{0}', space=smem, size = 0x200, scoped, tag = 'input window, operand 4, single buffered']
    #allocation12 [shape = 's32[1]{0}', space=sflag, size = 0x4, scoped, tag = 'scoped memory for tpu_custom_call.1']
    #allocation13 [shape = 'u8[5120]{0}', space=smem, size = 0x1400, scoped, tag = 'input window, operand 5, single buffered']
    #allocation14 [shape = 's32[1]{0}', space=sflag, size = 0x4, scoped, tag = 'scoped memory for tpu_custom_call.1']
    #allocation15 [shape = 'u8[8192]{0}', space=vmem, size = 0x2000, scoped, tag = 'input window, operand 6, single buffered']
    #allocation16 [shape = 'u8[8192]{0}', space=vmem, size = 0x2000, scoped, tag = 'input window, operand 7, single buffered']
    #allocation17 [shape = 's32[1]{0}', space=sflag, size = 0x4, scoped, tag = 'scoped memory for tpu_custom_call.1']
    #allocation18 [shape = 'u8[512]{0}', space=vmem, size = 0x400, scoped, tag = 'output window, operand 0, single buffered']
    %13 = vsyncpa [#allocation5], 0
    %14 = vsyncpa [#allocation8], 0
    %15 = vsyncpa [#allocation6], 0
    %16 = vsyncpa [#allocation12], 0
    %17 = vsyncpa [#allocation14], 0
    %18 = vsyncpa [#allocation3], 0
    %19 = vsyncpa [#allocation17], 0
    %20 = vsyncpa [#allocation4], 0
    // Predicated region
    $region2: #{tpu_custom_call.1} parent=1 // pred_check
      _
    $region3: #{tpu_custom_call.1} parent=1 // pred_check_branch
      %22 = sbr.rel (0) target = $region5
    $region4: #{tpu_custom_call.1} parent=1 // pred_region
      %s24 = ssub.s32 16, 16
      %25 = vsyncadd [#allocation5], %s24
      %28 = dma.hbm_to_smem %s0, 16, [#allocation2], [#allocation5]
    $region5: #{tpu_custom_call.1} parent=1 // pred_fallthru
      _
    // Predicated region
    $region6: #{tpu_custom_call.1} parent=1 // pred_check
      _
    $region7: #{tpu_custom_call.1} parent=1 // pred_check_branch
      %30 = sbr.rel (0) target = $region9
    $region8: #{tpu_custom_call.1} parent=1 // pred_region
      %s32 = ssub.s32 48, 48
      %33 = vsyncadd [#allocation8], %s32
      %36 = dma.hbm_to_smem %s1, 48, [#allocation7], [#allocation8]
    $region9: #{tpu_custom_call.1} parent=1 // pred_fallthru
      _
    // Predicated region
    $region10: #{tpu_custom_call.1} parent=1 // pred_check
      _
    $region11: #{tpu_custom_call.1} parent=1 // pred_check_branch
      %38 = sbr.rel (0) target = $region13
    $region12: #{tpu_custom_call.1} parent=1 // pred_region
      %s40 = ssub.s32 48, 48
      %41 = vsyncadd [#allocation8], %s40
      %44 = dma.hbm_to_smem %s2, 48, [#allocation9], [#allocation8]
    $region13: #{tpu_custom_call.1} parent=1 // pred_fallthru
      _
    // Predicated region
    $region14: #{tpu_custom_call.1} parent=1 // pred_check
      _
    $region15: #{tpu_custom_call.1} parent=1 // pred_check_branch
      %46 = sbr.rel (0) target = $region17
    $region16: #{tpu_custom_call.1} parent=1 // pred_region
      %s48 = ssub.s32 16, 16
      %49 = vsyncadd [#allocation6], %s48
      %s51 = sshll.u32 %s3, 4
      %s52 = int_to_ptr.vmem [resolvable:$true] %s51
      %54 = dma.vmem_to_smem %s52, 16, [#allocation10], [#allocation6]
    $region17: #{tpu_custom_call.1} parent=1 // pred_fallthru
      _
    // Predicated region
    $region18: #{tpu_custom_call.1} parent=1 // pred_check
      _
    $region19: #{tpu_custom_call.1} parent=1 // pred_check_branch
      %56 = sbr.rel (0) target = $region21
    $region20: #{tpu_custom_call.1} parent=1 // pred_region
      %s58 = ssub.s32 16, 16
      %59 = vsyncadd [#allocation12], %s58
      %s61 = sshll.u32 %s4, 4
      %s62 = int_to_ptr.vmem [resolvable:$true] %s61
      %64 = dma.vmem_to_smem %s62, 16, [#allocation11], [#allocation12]
    $region21: #{tpu_custom_call.1} parent=1 // pred_fallthru
      _
    // Predicated region
    $region22: #{tpu_custom_call.1} parent=1 // pred_check
      _
    $region23: #{tpu_custom_call.1} parent=1 // pred_check_branch
      %66 = sbr.rel (0) target = $region25
    $region24: #{tpu_custom_call.1} parent=1 // pred_region
      %s68 = ssub.s32 160, 160
      %69 = vsyncadd [#allocation14], %s68
      %72 = dma.hbm_to_smem %s5, 160, [#allocation13], [#allocation14]
    $region25: #{tpu_custom_call.1} parent=1 // pred_fallthru
      _
    // Predicated region
    $region26: #{tpu_custom_call.1} parent=1 // pred_check
      _
    $region27: #{tpu_custom_call.1} parent=1 // pred_check_branch
      %74 = sbr.rel (0) target = $region29
    $region28: #{tpu_custom_call.1} parent=1 // pred_region
      %s76 = ssub.s32 256, 256
      %77 = vsyncadd [#allocation3], %s76
      %s78 = sshll.u32 [#allocation15], 4
      %s79 = int_to_ptr.vmem [resolvable:$true] %s78
      %84 = dma.hbm_to_vmem [thread:$0]  %s6, 256, %s79, [#allocation3], 128, 128, 8
    $region29: #{tpu_custom_call.1} parent=1 // pred_fallthru
      _
    // Predicated region
    $region30: #{tpu_custom_call.1} parent=1 // pred_check
      _
    $region31: #{tpu_custom_call.1} parent=1 // pred_check_branch
      %86 = sbr.rel (0) target = $region33
    $region32: #{tpu_custom_call.1} parent=1 // pred_region
      %s88 = ssub.s32 256, 256
      %89 = vsyncadd [#allocation17], %s88
      %s90 = sshll.u32 [#allocation16], 4
      %s91 = int_to_ptr.vmem [resolvable:$true] %s90
      %96 = dma.hbm_to_vmem [thread:$0]  %s7, 256, %s91, [#allocation17], 128, 128, 8
    $region33: #{tpu_custom_call.1} parent=1 // pred_fallthru
      _
    // Predicated region
    $region34: #{tpu_custom_call.1} parent=1 // pred_check
      _
    $region35: #{tpu_custom_call.1} parent=1 // pred_check_branch
      %98 = sbr.rel (0) target = $region37
    $region36: #{tpu_custom_call.1} parent=1 // pred_region
      %99 = dma.done [#allocation5], 16
    $region37: #{tpu_custom_call.1} parent=1 // pred_fallthru
      _
    // Predicated region
    $region38: #{tpu_custom_call.1} parent=1 // pred_check
      _
    $region39: #{tpu_custom_call.1} parent=1 // pred_check_branch
      %101 = sbr.rel (0) target = $region41
    $region40: #{tpu_custom_call.1} parent=1 // pred_region
      %102 = dma.done [#allocation8], 48
    $region41: #{tpu_custom_call.1} parent=1 // pred_fallthru
      _
    // Predicated region
    $region42: #{tpu_custom_call.1} parent=1 // pred_check
      _
    $region43: #{tpu_custom_call.1} parent=1 // pred_check_branch
      %104 = sbr.rel (0) target = $region45
    $region44: #{tpu_custom_call.1} parent=1 // pred_region
      %105 = dma.done [#allocation8], 48
    $region45: #{tpu_custom_call.1} parent=1 // pred_fallthru
      _
    // Predicated region
    $region46: #{tpu_custom_call.1} parent=1 // pred_check
      _
    $region47: #{tpu_custom_call.1} parent=1 // pred_check_branch
      %107 = sbr.rel (0) target = $region49
    $region48: #{tpu_custom_call.1} parent=1 // pred_region
      %108 = dma.done [#allocation6], 16
    $region49: #{tpu_custom_call.1} parent=1 // pred_fallthru
      _
    // Predicated region
    $region50: #{tpu_custom_call.1} parent=1 // pred_check
      _
    $region51: #{tpu_custom_call.1} parent=1 // pred_check_branch
      %110 = sbr.rel (0) target = $region53
    $region52: #{tpu_custom_call.1} parent=1 // pred_region
      %111 = dma.done [#allocation12], 16
    $region53: #{tpu_custom_call.1} parent=1 // pred_fallthru
      _
    // Predicated region
    $region54: #{tpu_custom_call.1} parent=1 // pred_check
      _
    $region55: #{tpu_custom_call.1} parent=1 // pred_check_branch
      %113 = sbr.rel (0) target = $region57
    $region56: #{tpu_custom_call.1} parent=1 // pred_region
      %114 = dma.done [#allocation14], 160
    $region57: #{tpu_custom_call.1} parent=1 // pred_fallthru
      _
    // Predicated region
    $region58: #{tpu_custom_call.1} parent=1 // pred_check
      _
    $region59: #{tpu_custom_call.1} parent=1 // pred_check_branch
      %116 = sbr.rel (0) target = $region61
    $region60: #{tpu_custom_call.1} parent=1 // pred_region
      %117 = dma.done [#allocation3], 256
    $region61: #{tpu_custom_call.1} parent=1 // pred_fallthru
      _
    // Predicated region
    $region62: #{tpu_custom_call.1} parent=1 // pred_check
      _
    $region63: #{tpu_custom_call.1} parent=1 // pred_check_branch
      %119 = sbr.rel (0) target = $region65
    $region64: #{tpu_custom_call.1} parent=1 // pred_region
      %120 = dma.done [#allocation17], 256
    $region65: #{tpu_custom_call.1} parent=1 // pred_fallthru
      _
    %121 = sfence
    %s122 = sld [smem:[#allocation2]]
    %s123 = sld [smem:[#allocation7 + %s122]]
    %s124 = sld [smem:[#allocation9 + %s122]]
    %v125 = vld [vmem:[#allocation15] sm:$0xff]
    %v126 = vld [vmem:[#allocation16] sm:$0xff]
    %v127 = vstv %s123
    %v128 = vmul.f32 %v127, %v125
    %v129 = vstv %s124
    %v130 = vmul.f32 %v129, %v126
    %v131 = vadd.f32 %v128, %v130
    %s132 = sld [smem:[#allocation10]]
    %v133 = vstv %s132
    %v134 = vmul.f32 %v131, %v133
    %s135 = sld [smem:[#allocation10 + $0x4]]
    %v136 = vstv %s135
    %v137 = vmul.f32 %v131, %v136
    %v139 = vrot.slane %v137, 2
    %v141 = vadd.f32 %v134, %v139
    %s142 = sld [smem:[#allocation10 + $0x8]]
    %v143 = vstv %s142
    %v144 = vmul.f32 %v131, %v143
    %v146 = vrot.slane %v144, 4
    %v148 = vadd.f32 %v141, %v146
    %s149 = sld [smem:[#allocation10 + $0xc]]
    %v150 = vstv %s149
    %v151 = vmul.f32 %v131, %v150
    %v153 = vrot.slane %v151, 6
    %v155 = vadd.f32 %v148, %v153
    %s156 = sld [smem:[#allocation11]]
    %s157 = smul.u32 %s122, 4
    %s158 = sld [smem:[#allocation13 + %s157]]
    %s159 = sadd.f32 %s156, %s158
    %v160 = vstv %s159
    %v161 = vadd.f32 %v155, %v160
    %v162 = vsub.f32 %v126, %v161
    %v163 = vand.u32 2147483647, %v162
    %v164 = vadd.f32 %v163, 0.0
    %s165 = sld [smem:[#allocation10 + $0x1]]
    %v166 = vstv %s165
    %v167 = vmul.f32 %v131, %v166
    %s168 = sld [smem:[#allocation10 + $0x5]]
    %v169 = vstv %s168
    %v170 = vmul.f32 %v131, %v169
    %v172 = vrot.slane %v170, 2
    %v174 = vadd.f32 %v167, %v172
    %s175 = sld [smem:[#allocation10 + $0x9]]
    %v176 = vstv %s175
    %v177 = vmul.f32 %v131, %v176
    %v179 = vrot.slane %v177, 4
    %v181 = vadd.f32 %v174, %v179
    %s182 = sld [smem:[#allocation10 + $0xd]]
    %v183 = vstv %s182
    %v184 = vmul.f32 %v131, %v183
    %v186 = vrot.slane %v184, 6
    %v188 = vadd.f32 %v181, %v186
    %s189 = sld [smem:[#allocation11 + $0x1]]
    %s190 = sadd.s32 %s157, 1
    %s191 = sld [smem:[#allocation13 + %s190]]
    %s192 = sadd.f32 %s189, %s191
    %v193 = vstv %s192
    %v194 = vadd.f32 %v188, %v193
    %v196 = vrot.slane %v194, 6
    %v198 = vsub.f32 %v126, %v196
    %v199 = vand.u32 2147483647, %v198
    %v201 = vrot.slane %v199, 2
    %v203 = vadd.f32 %v164, %v201
    %s204 = sld [smem:[#allocation10 + $0x2]]
    %v205 = vstv %s204
    %v206 = vmul.f32 %v131, %v205
    %s207 = sld [smem:[#allocation10 + $0x6]]
    %v208 = vstv %s207
    %v209 = vmul.f32 %v131, %v208
    %v211 = vrot.slane %v209, 2
    %v213 = vadd.f32 %v206, %v211
    %s214 = sld [smem:[#allocation10 + $0xa]]
    %v215 = vstv %s214
    %v216 = vmul.f32 %v131, %v215
    %v218 = vrot.slane %v216, 4
    %v220 = vadd.f32 %v213, %v218
    %s221 = sld [smem:[#allocation10 + $0xe]]
    %v222 = vstv %s221
    %v223 = vmul.f32 %v131, %v222
    %v225 = vrot.slane %v223, 6
    %v227 = vadd.f32 %v220, %v225
    %s228 = sld [smem:[#allocation11 + $0x2]]
    %s229 = sadd.s32 %s157, 2
    %s230 = sld [smem:[#allocation13 + %s229]]
    %s231 = sadd.f32 %s228, %s230
    %v232 = vstv %s231
    %v233 = vadd.f32 %v227, %v232
    %v235 = vrot.slane %v233, 4
    %v237 = vsub.f32 %v126, %v235
    %v238 = vand.u32 2147483647, %v237
    %v240 = vrot.slane %v238, 4
    %v242 = vadd.f32 %v203, %v240
    %s243 = sld [smem:[#allocation10 + $0x3]]
    %v244 = vstv %s243
    %v245 = vmul.f32 %v131, %v244
    %s246 = sld [smem:[#allocation10 + $0x7]]
    %v247 = vstv %s246
    %v248 = vmul.f32 %v131, %v247
    %v250 = vrot.slane %v248, 2
    %v252 = vadd.f32 %v245, %v250
    %s253 = sld [smem:[#allocation10 + $0xb]]
    %v254 = vstv %s253
    %v255 = vmul.f32 %v131, %v254
    %v257 = vrot.slane %v255, 4
    %v259 = vadd.f32 %v252, %v257
    %s260 = sld [smem:[#allocation10 + $0xf]]
    %v261 = vstv %s260
    %v262 = vmul.f32 %v131, %v261
    %v264 = vrot.slane %v262, 6
    %v266 = vadd.f32 %v259, %v264
    %s267 = sld [smem:[#allocation11 + $0x3]]
    %s268 = sadd.s32 %s157, 3
    %s269 = sld [smem:[#allocation13 + %s268]]
    %s270 = sadd.f32 %s267, %s269
    %v271 = vstv %s270
    %v272 = vadd.f32 %v266, %v271
    %v274 = vrot.slane %v272, 2
    %v276 = vsub.f32 %v126, %v274
    %v277 = vand.u32 2147483647, %v276
    %v279 = vrot.slane %v277, 6
    %v281 = vadd.f32 %v242, %v279
    %s282 = sld [smem:[#allocation2 + $0x1]]
    %s283 = sld [smem:[#allocation7 + %s282]]
    %s284 = sld [smem:[#allocation9 + %s282]]
    %s285 = scalar_lea.vmem [#allocation15], 8
    %v286 = vld [vmem:[%s285] sm:$0xff]
    %s287 = scalar_lea.vmem [#allocation16], 8
    %v288 = vld [vmem:[%s287] sm:$0xff]
    %v289 = vstv %s283
    %v290 = vmul.f32 %v289, %v286
    %v291 = vstv %s284
    %v292 = vmul.f32 %v291, %v288
    %v293 = vadd.f32 %v290, %v292
    %v294 = vmul.f32 %v293, %v133
    %v295 = vmul.f32 %v293, %v136
    %v297 = vrot.slane %v295, 2
    %v299 = vadd.f32 %v294, %v297
    %v300 = vmul.f32 %v293, %v143
    %v302 = vrot.slane %v300, 4
    %v304 = vadd.f32 %v299, %v302
    %v305 = vmul.f32 %v293, %v150
    %v307 = vrot.slane %v305, 6
    %v309 = vadd.f32 %v304, %v307
    %s310 = smul.u32 %s282, 4
    %s311 = sld [smem:[#allocation13 + %s310]]
    %s312 = sadd.f32 %s156, %s311
    %v313 = vstv %s312
    %v314 = vadd.f32 %v309, %v313
    %v315 = vsub.f32 %v288, %v314
    %v316 = vand.u32 2147483647, %v315
    %v317 = vadd.f32 %v281, %v316
    %v318 = vmul.f32 %v293, %v166
    %v319 = vmul.f32 %v293, %v169
    %v321 = vrot.slane %v319, 2
    %v323 = vadd.f32 %v318, %v321
    %v324 = vmul.f32 %v293, %v176
    %v326 = vrot.slane %v324, 4
    %v328 = vadd.f32 %v323, %v326
    %v329 = vmul.f32 %v293, %v183
    %v331 = vrot.slane %v329, 6
    %v333 = vadd.f32 %v328, %v331
    %s334 = sadd.s32 %s310, 1
    %s335 = sld [smem:[#allocation13 + %s334]]
    %s336 = sadd.f32 %s189, %s335
    %v337 = vstv %s336
    %v338 = vadd.f32 %v333, %v337
    %v340 = vrot.slane %v338, 6
    %v342 = vsub.f32 %v288, %v340
    %v343 = vand.u32 2147483647, %v342
    %v345 = vrot.slane %v343, 2
    %v347 = vadd.f32 %v317, %v345
    %v348 = vmul.f32 %v293, %v205
    %v349 = vmul.f32 %v293, %v208
    %v351 = vrot.slane %v349, 2
    %v353 = vadd.f32 %v348, %v351
    %v354 = vmul.f32 %v293, %v215
    %v356 = vrot.slane %v354, 4
    %v358 = vadd.f32 %v353, %v356
    %v359 = vmul.f32 %v293, %v222
    %v361 = vrot.slane %v359, 6
    %v363 = vadd.f32 %v358, %v361
    %s364 = sadd.s32 %s310, 2
    %s365 = sld [smem:[#allocation13 + %s364]]
    %s366 = sadd.f32 %s228, %s365
    %v367 = vstv %s366
    %v368 = vadd.f32 %v363, %v367
    %v370 = vrot.slane %v368, 4
    %v372 = vsub.f32 %v288, %v370
    %v373 = vand.u32 2147483647, %v372
    %v375 = vrot.slane %v373, 4
    %v377 = vadd.f32 %v347, %v375
    %v378 = vmul.f32 %v293, %v244
    %v379 = vmul.f32 %v293, %v247
    %v381 = vrot.slane %v379, 2
    %v383 = vadd.f32 %v378, %v381
    %v384 = vmul.f32 %v293, %v254
    %v386 = vrot.slane %v384, 4
    %v388 = vadd.f32 %v383, %v386
    %v389 = vmul.f32 %v293, %v261
    %v391 = vrot.slane %v389, 6
    %v393 = vadd.f32 %v388, %v391
    %s394 = sadd.s32 %s310, 3
    %s395 = sld [smem:[#allocation13 + %s394]]
    %s396 = sadd.f32 %s267, %s395
    %v397 = vstv %s396
    %v398 = vadd.f32 %v393, %v397
    %v400 = vrot.slane %v398, 2
    %v402 = vsub.f32 %v288, %v400
    %v403 = vand.u32 2147483647, %v402
    %v405 = vrot.slane %v403, 6
    %v407 = vadd.f32 %v377, %v405
    %vm408 = vcmask 1041408
    %v409 = vsel %vm408, %v407, 0.0
    %410 = vadd.xlane.f32.xlu0 %v409
    %v411 = vpop.xlane.xlu0 %410
    %v412 = vrot.slane %v411, 4
    %v413 = vadd.f32 %v411, %v412
    %v414 = vrot.slane %v413, 2
    %v415 = vadd.f32 %v413, %v414
    %v416 = vrot.slane %v415, 1
    %v417 = vadd.f32 %v415, %v416
    %s418 = vtos %v417
    %v419 = vstv %s418
    %v420 = vmul.f32 %v419, 0.00048828125
    %vm421 = vcmask 0
    %422 = vst.msk [vmem:[#allocation18] sm:$0x1] %vm421, %v420
    // Predicated region
    $region66: #{tpu_custom_call.1} parent=1 // pred_check
      _
    $region67: #{tpu_custom_call.1} parent=1 // pred_check_branch
      %424 = sbr.rel (0) target = $region69
    $region68: #{tpu_custom_call.1} parent=1 // pred_region
      %s426 = ssub.s32 16, 16
      %427 = vsyncadd [#allocation4], %s426
      %s429 = sshll.u32 [#allocation18], 4
      %s430 = int_to_ptr.vmem [resolvable:$true] %s429
      %432 = dma.vmem_to_hbm [thread:$0]  %s430, 16, %s8, [#allocation4]
    $region69: #{tpu_custom_call.1} parent=1 // pred_fallthru
      _
    // Predicated region
    $region70: #{tpu_custom_call.1} parent=1 // pred_check
      _
    $region71: #{tpu_custom_call.1} parent=1 // pred_check_branch
      %434 = sbr.rel (0) target = $region73
    $region72: #{tpu_custom_call.1} parent=1 // pred_region
      %435 = dma.done [#allocation4], 16
    $region73: #{tpu_custom_call.1} parent=1 // pred_fallthru
      _
    %436 = vsyncpa [#allocation3], 1
    %437 = vsyncpa [#allocation17], 1
    %438 = vsyncpa [#allocation4], 1
    %439 = vsyncpa [#allocation5], 1
    %440 = vsyncpa [#allocation8], 1
    %441 = vsyncpa [#allocation14], 1
    %442 = vsyncpa [#allocation6], 1
    %443 = vsyncpa [#allocation12], 1

</llo_original>
